<compile_context>
chip_gen: v6e
topology: v6e:2x2x1
jax: 0.10.0
libtpu: 0.0.40
codegen_flags: <defaults>
</compile_context>

<pallas_src>
import functools

import jax
import jax.numpy as jnp
from jax.experimental import pallas as pl
from jax.experimental.pallas import tpu as pltpu

_LANE = 128      # last block dim multiple
_SUBLANE = 8     # second-to-last block dim multiple (f32)


def _round_up(x, m):
    return ((x + m - 1) // m) * m


def _sublane_multiple(dtype):
    # f32 -> 8, bf16 -> 16, int8/fp8 -> 32 (sub-32-bit dtypes pack along sublanes)
    itemsize = jnp.dtype(dtype).itemsize
    return _SUBLANE * max(1, 4 // itemsize)


def _vmem_capacity_bytes():
    try:
        return int(pltpu.get_tpu_info().vmem_capacity_bytes)
    except Exception:
        return 64 * 1024 * 1024          # conservative (v7x-sized) fallback


def _apply_activation(y, activation):
    if activation == "relu":
        return jnp.maximum(y, 0.0)
    if activation == "tanh":
        return jnp.tanh(y)
    if activation in ("linear", "identity", None):
        return y
    raise ValueError(f"unknown activation: {activation}")


def _feedforward_kernel(x_ref, *refs, activations, num_layers):
    """Fused Linear -> activation (-> dropout=identity) stack on one row-tile.

    refs = (w0, b0, w1, b1, ..., o_ref).  Hidden activations never leave the
    chip.  Weights arrive already in the compute dtype (pre-cast in the
    wrapper); each matmul accumulates in f32 on the MXU.
    """
    o_ref = refs[-1]
    h = x_ref[...]
    for layer in range(num_layers):
        w_ref = refs[2 * layer]
        b_ref = refs[2 * layer + 1]
        y = jnp.dot(h.astype(w_ref.dtype), w_ref[...],
                    preferred_element_type=jnp.float32)
        y = y + b_ref[...].astype(jnp.float32)       # (1, N) bias broadcast
        h = _apply_activation(y, activations[layer])
    o_ref[...] = h.astype(o_ref.dtype)


def _fused_feedforward(x_p, flat_wb, out_dim_p, activations, *, tile_m,
                       vmem_limit_bytes, out_dtype, single_buffer_weights):
    M_p, K0_p = x_p.shape
    num_layers = len(activations)
    grid = (M_p // tile_m,)

    wb_kwargs = {}
    if single_buffer_weights:
        # resident weights: never re-fetched, so 1-deep buffering halves VMEM
        wb_kwargs = dict(pipeline_mode=pl.Buffered(1))

    in_specs = [pl.BlockSpec((tile_m, K0_p), lambda i: (i, 0))]   # x row-tile
    for li in range(num_layers):
        w_p = flat_wb[2 * li]
        b_p = flat_wb[2 * li + 1]
        # constant index maps -> DMA'd into VMEM once, reused by every row-tile
        in_specs.append(pl.BlockSpec(w_p.shape, lambda i: (0, 0), **wb_kwargs))
        in_specs.append(pl.BlockSpec(b_p.shape, lambda i: (0, 0), **wb_kwargs))

    out_specs = pl.BlockSpec((tile_m, out_dim_p), lambda i: (i, 0))

    dims_p = [K0_p] + [flat_wb[2 * li].shape[1] for li in range(num_layers)]
    flops = sum(2 * M_p * dims_p[li] * dims_p[li + 1] for li in range(num_layers))
    transcendentals = sum(M_p * dims_p[li + 1]
                          for li in range(num_layers) if activations[li] == "tanh")
    bytes_accessed = (x_p.size * x_p.dtype.itemsize
                      + sum(int(a.size) * a.dtype.itemsize for a in flat_wb)
                      + M_p * out_dim_p * jnp.dtype(out_dtype).itemsize)

    return pl.pallas_call(
        functools.partial(_feedforward_kernel,
                          activations=tuple(activations),
                          num_layers=num_layers),
        out_shape=jax.ShapeDtypeStruct((M_p, out_dim_p), out_dtype),
        grid_spec=pltpu.PrefetchScalarGridSpec(
            num_scalar_prefetch=0,
            grid=grid,
            in_specs=in_specs,
            out_specs=out_specs,
        ),
        compiler_params=pltpu.CompilerParams(
            dimension_semantics=("parallel",),
            vmem_limit_bytes=int(vmem_limit_bytes),
        ),
        cost_estimate=pl.CostEstimate(
            flops=int(flops),
            transcendentals=int(transcendentals),
            bytes_accessed=int(bytes_accessed),
        ),
    )(x_p, *flat_wb)


class FeedForwardPallas:
    """JAX/Pallas equivalent of the PyTorch FeedForward module (eval mode)."""

    def __init__(self, input_dim, num_layers, hidden_dims, activations, dropout,
                 key, *, compute_dtype=jnp.bfloat16, param_dtype=jnp.float32):
        if not isinstance(hidden_dims, list):
            hidden_dims = [hidden_dims] * num_layers
        if not isinstance(activations, list):
            activations = [activations] * num_layers
        if not isinstance(dropout, list):
            dropout = [dropout] * num_layers
        assert len(hidden_dims) == num_layers
        self.activations = activations
        self.dropout = dropout                      # identity at inference
        self.input_dim = input_dim
        self.output_dim = hidden_dims[-1]
        self.compute_dtype = jnp.dtype(
            compute_dtype if compute_dtype is not None else param_dtype)

        dims = [input_dim] + hidden_dims
        self.dims = dims
        self.dims_p = [_round_up(d, _LANE) for d in dims]

        # --- raw params, nn.Linear-style init: uniform(+-1/sqrt(fan_in)) -----
        self.params = []
        input_dims = [input_dim] + hidden_dims[:-1]
        for d_in, d_out in zip(input_dims, hidden_dims):
            key, wk, bk = jax.random.split(key, 3)
            bound = 1.0 / float(d_in) ** 0.5
            w = jax.random.uniform(wk, (d_in, d_out), param_dtype, -bound, bound)
            b = jax.random.uniform(bk, (d_out,), param_dtype, -bound, bound)
            self.params.append((w, b))

        # --- pad ONCE to lane multiples and pre-cast weights to compute_dtype.
        # Zero padding is numerically exact: padded input columns hit zero
        # weight rows and relu/tanh/linear all map 0 -> 0.  Biases stay f32
        # (added after the f32 MXU accumulation).
        self._flat_wb = []
        for li, (w, b) in enumerate(self.params):
            d_in, d_out = w.shape
            w_p = jnp.zeros((self.dims_p[li], self.dims_p[li + 1]),
                            self.compute_dtype)
            w_p = w_p.at[:d_in, :d_out].set(w.astype(self.compute_dtype))
            b_p = jnp.zeros((1, self.dims_p[li + 1]), jnp.float32)
            b_p = b_p.at[0, :d_out].set(b.astype(jnp.float32))
            self._flat_wb.extend([w_p, b_p])
        self._weight_bytes = sum(int(a.size) * a.dtype.itemsize
                                 for a in self._flat_wb)

    def _pick_tile_and_vmem(self, M, x_dtype, tile_m, vmem_limit_bytes):
        sub = _sublane_multiple(x_dtype)
        cap = _vmem_capacity_bytes()
        if vmem_limit_bytes is None:
            # ~96 MiB on 128-MiB chips (v5e/v6e), ~48 MiB on v7x (64 MiB/TC)
            vmem_limit_bytes = min(cap * 3 // 4, 100 * 1024 * 1024)
        if tile_m is None:
            tile_m = 512 if cap >= 100 * 1024 * 1024 else 256
            if M <= tile_m:
                # keep >= 2 row tiles when possible so both v7x TCs get work
                tile_m = max(sub, _round_up((M + 1) // 2, sub))
        tile_m = max(sub, _round_up(min(tile_m, max(M, 1)), sub))

        # VMEM budget (critical on v7x): 2x double-buffered x tile + 2x out
        # tile + single-buffered weights + f32 hidden activations.  Shrink
        # tile_m rather than OOM/spill.
        K0_p, N_p = self.dims_p[0], self.dims_p[-1]
        max_hidden_p = max(self.dims_p[1:])
        x_bytes = jnp.dtype(x_dtype).itemsize
        while tile_m > sub:
            need = (2 * tile_m * K0_p * x_bytes
                    + 2 * tile_m * N_p * x_bytes
                    + self._weight_bytes
                    + 2 * tile_m * max_hidden_p * 4)
            if need <= int(vmem_limit_bytes * 0.9):
                break
            tile_m = max(sub, _round_up(tile_m // 2, sub))
        return tile_m, vmem_limit_bytes

    def __call__(self, x, *, tile_m=None, vmem_limit_bytes=None,
                 single_buffer_weights=True):
        M, K0 = x.shape
        assert K0 == self.input_dim
        tile_m, vmem_limit_bytes = self._pick_tile_and_vmem(
            M, x.dtype, tile_m, vmem_limit_bytes)

        M_p = _round_up(M, tile_m)
        K0_p = self.dims_p[0]
        if M_p == M and K0_p == K0:
            x_p = x                                   # no padding round trip
        else:
            x_p = jnp.zeros((M_p, K0_p), x.dtype).at[:M, :K0].set(x)

        kwargs = dict(tile_m=tile_m, vmem_limit_bytes=vmem_limit_bytes,
                      out_dtype=x.dtype)
        try:
            out_p = _fused_feedforward(
                x_p, self._flat_wb, self.dims_p[-1], tuple(self.activations),
                single_buffer_weights=single_buffer_weights, **kwargs)
        except Exception:
            if not single_buffer_weights:
                raise
            # fall back to default (double-buffered) weight specs
            out_p = _fused_feedforward(
                x_p, self._flat_wb, self.dims_p[-1], tuple(self.activations),
                single_buffer_weights=False, **kwargs)

        if M_p == M and self.dims_p[-1] == self.output_dim:
            return out_p                              # no slicing round trip
        return out_p[:M, :self.output_dim]


if __name__ == "__main__":
    key = jax.random.PRNGKey(0)
    key, xk, pk = jax.random.split(key, 3)

    batch = 64
    input_dim = 32
    num_layers = 2
    hidden_dims = [64, 32]
    activations = "relu"
    dropout = 0.1            # identity at inference

    x = jax.random.normal(xk, (batch, input_dim), jnp.float32)

    # ---- f32 weights: parity with the PyTorch forward (eval mode) -----------
    ff32 = FeedForwardPallas(input_dim, num_layers, hidden_dims, activations,
                             dropout, pk, compute_dtype=jnp.float32)
    out32 = jax.block_until_ready(ff32(x))

    ref = x
    for (w, b), act in zip(ff32.params, ff32.activations):
        ref = jnp.dot(ref, w, precision=jax.lax.Precision.HIGHEST) + b
        if act == "relu":
            ref = jnp.maximum(ref, 0.0)
        elif act == "tanh":
            ref = jnp.tanh(ref)
    assert out32.shape == (batch, ff32.output_dim)
    # loose enough to cover any XLA/MXU f32-matmul precision-mode difference
    assert jnp.allclose(out32, ref, atol=2e-2, rtol=2e-2)

    # ---- bf16 weights (default): MXU-native on v6e/v7x, f32 accumulation ----
    ffbf = FeedForwardPallas(input_dim, num_layers, hidden_dims, activations,
                             dropout, pk)            # compute_dtype=bf16 default
    outbf = jax.block_until_ready(ffbf(x))

    refbf = x
    for (w, b), act in zip(ffbf.params, ffbf.activations):
        refbf = jnp.dot(refbf.astype(jnp.bfloat16), w.astype(jnp.bfloat16),
                        preferred_element_type=jnp.float32) + b
        if act == "relu":
            refbf = jnp.maximum(refbf, 0.0)
        elif act == "tanh":
            refbf = jnp.tanh(refbf)
    assert outbf.shape == (batch, ffbf.output_dim)
    assert jnp.allclose(outbf, refbf.astype(outbf.dtype), atol=3e-2, rtol=3e-2)

    print("KERNEL_OK")
</pallas_src>

<mosaic_0001>
module attributes {stable_mosaic.version = 11 : i64} {
  func.func @_feedforward_kernel(%arg0: i32, %arg1: memref<32x128xf32, #tpu.memory_space<vmem>>, %arg2: memref<128x128xf32, #tpu.memory_space<vmem>>, %arg3: memref<1x128xf32, #tpu.memory_space<vmem>>, %arg4: memref<128x128xf32, #tpu.memory_space<vmem>>, %arg5: memref<1x128xf32, #tpu.memory_space<vmem>>, %arg6: memref<32x128xf32, #tpu.memory_space<vmem>>) attributes {dimension_semantics = [#tpu.dimension_semantics<parallel>], iteration_bounds = array<i64: 2>, scalar_prefetch = 0 : i64, scratch_operands = 0 : i64, tpu.core_type = #tpu.core_type<tc>, window_params = [{transform_indices = @transform_0, window_bounds = array<i64: 32, 128>}, {pipeline_mode = #tpu.pipeline_mode<synchronous>, transform_indices = @transform_1, window_bounds = array<i64: 128, 128>}, {pipeline_mode = #tpu.pipeline_mode<synchronous>, transform_indices = @transform_2, window_bounds = array<i64: 1, 128>}, {pipeline_mode = #tpu.pipeline_mode<synchronous>, transform_indices = @transform_3, window_bounds = array<i64: 128, 128>}, {pipeline_mode = #tpu.pipeline_mode<synchronous>, transform_indices = @transform_4, window_bounds = array<i64: 1, 128>}, {transform_indices = @transform_5, window_bounds = array<i64: 32, 128>}]} {
    %c0 = arith.constant 0 : index
    %c0_0 = arith.constant 0 : index
    %0 = vector.load %arg1[%c0, %c0_0] : memref<32x128xf32, #tpu.memory_space<vmem>>, vector<32x128xf32>
    %c0_1 = arith.constant 0 : index
    %c0_2 = arith.constant 0 : index
    %1 = vector.load %arg2[%c0_1, %c0_2] : memref<128x128xf32, #tpu.memory_space<vmem>>, vector<128x128xf32>
    %cst = arith.constant dense<0.000000e+00> : vector<32x128xf32>
    %2 = tpu.matmul %0, %1, %cst {dimension_numbers = #tpu.dot_dimension_numbers<[1], [0], [0], [1], [0, 0, 1, 1], [], []>} : vector<32x128xf32>, vector<128x128xf32>, vector<32x128xf32> -> vector<32x128xf32>
    %c0_3 = arith.constant 0 : index
    %c0_4 = arith.constant 0 : index
    %3 = vector.load %arg3[%c0_3, %c0_4] : memref<1x128xf32, #tpu.memory_space<vmem>>, vector<1x128xf32>
    %4 = vector.broadcast %3 : vector<1x128xf32> to vector<32x128xf32>
    %5 = arith.addf %2, %4 : vector<32x128xf32>
    %cst_5 = arith.constant 0.000000e+00 : f32
    %6 = vector.broadcast %cst_5 : f32 to vector<32x128xf32>
    %7 = arith.maximumf %5, %6 : vector<32x128xf32>
    %c0_6 = arith.constant 0 : index
    %c0_7 = arith.constant 0 : index
    %8 = vector.load %arg4[%c0_6, %c0_7] : memref<128x128xf32, #tpu.memory_space<vmem>>, vector<128x128xf32>
    %cst_8 = arith.constant dense<0.000000e+00> : vector<32x128xf32>
    %9 = tpu.matmul %7, %8, %cst_8 {dimension_numbers = #tpu.dot_dimension_numbers<[1], [0], [0], [1], [0, 0, 1, 1], [], []>} : vector<32x128xf32>, vector<128x128xf32>, vector<32x128xf32> -> vector<32x128xf32>
    %c0_9 = arith.constant 0 : index
    %c0_10 = arith.constant 0 : index
    %10 = vector.load %arg5[%c0_9, %c0_10] : memref<1x128xf32, #tpu.memory_space<vmem>>, vector<1x128xf32>
    %11 = vector.broadcast %10 : vector<1x128xf32> to vector<32x128xf32>
    %12 = arith.addf %9, %11 : vector<32x128xf32>
    %cst_11 = arith.constant 0.000000e+00 : f32
    %13 = vector.broadcast %cst_11 : f32 to vector<32x128xf32>
    %14 = arith.maximumf %12, %13 : vector<32x128xf32>
    %c0_12 = arith.constant 0 : index
    %c0_13 = arith.constant 0 : index
    %15 = vector.load %arg6[%c0_12, %c0_13] : memref<32x128xf32, #tpu.memory_space<vmem>>, vector<32x128xf32>
    tpu.vector_store %arg6[%c0_12, %c0_13], %14 {strides = array<i32>} : memref<32x128xf32, #tpu.memory_space<vmem>>, vector<32x128xf32>,
    return
  }
  func.func @transform_0(%arg0: i32) -> (i32, i32) {
    %c0_i32 = arith.constant 0 : i32
    %c0_i32_0 = arith.constant 0 : i32
    return %arg0, %c0_i32 : i32, i32
  }
  func.func @transform_1(%arg0: i32) -> (i32, i32) {
    %c0_i32 = arith.constant 0 : i32
    %c0_i32_0 = arith.constant 0 : i32
    %c0_i32_1 = arith.constant 0 : i32
    return %c0_i32, %c0_i32_0 : i32, i32
  }
  func.func @transform_2(%arg0: i32) -> (i32, i32) {
    %c0_i32 = arith.constant 0 : i32
    %c0_i32_0 = arith.constant 0 : i32
    %c0_i32_1 = arith.constant 0 : i32
    return %c0_i32, %c0_i32_0 : i32, i32
  }
  func.func @transform_3(%arg0: i32) -> (i32, i32) {
    %c0_i32 = arith.constant 0 : i32
    %c0_i32_0 = arith.constant 0 : i32
    %c0_i32_1 = arith.constant 0 : i32
    return %c0_i32, %c0_i32_0 : i32, i32
  }
  func.func @transform_4(%arg0: i32) -> (i32, i32) {
    %c0_i32 = arith.constant 0 : i32
    %c0_i32_0 = arith.constant 0 : i32
    %c0_i32_1 = arith.constant 0 : i32
    return %c0_i32, %c0_i32_0 : i32, i32
  }
  func.func @transform_5(%arg0: i32) -> (i32, i32) {
    %c0_i32 = arith.constant 0 : i32
    %c0_i32_0 = arith.constant 0 : i32
    return %arg0, %c0_i32 : i32, i32
  }
}

module attributes {stable_mosaic.version = 11 : i64} {
  func.func @_feedforward_kernel(%arg0: i32, %arg1: memref<32x128xf32, #tpu.memory_space<vmem>>, %arg2: memref<128x128xf32, #tpu.memory_space<vmem>>, %arg3: memref<1x128xf32, #tpu.memory_space<vmem>>, %arg4: memref<128x128xf32, #tpu.memory_space<vmem>>, %arg5: memref<1x128xf32, #tpu.memory_space<vmem>>, %arg6: memref<32x128xf32, #tpu.memory_space<vmem>>) attributes {dimension_semantics = [#tpu.dimension_semantics<parallel>], iteration_bounds = array<i64: 2>, scalar_prefetch = 0 : i64, scratch_operands = 0 : i64, tpu.core_type = #tpu.core_type<tc>, window_params = [{transform_indices = @transform_0, window_bounds = array<i64: 32, 128>}, {pipeline_mode = #tpu.pipeline_mode<synchronous>, transform_indices = @transform_1, window_bounds = array<i64: 128, 128>}, {pipeline_mode = #tpu.pipeline_mode<synchronous>, transform_indices = @transform_2, window_bounds = array<i64: 1, 128>}, {pipeline_mode = #tpu.pipeline_mode<synchronous>, transform_indices = @transform_3, window_bounds = array<i64: 128, 128>}, {pipeline_mode = #tpu.pipeline_mode<synchronous>, transform_indices = @transform_4, window_bounds = array<i64: 1, 128>}, {transform_indices = @transform_5, window_bounds = array<i64: 32, 128>}]} {
    %c0 = arith.constant 0 : index
    %c0_0 = arith.constant 0 : index
    %0 = vector.load %arg1[%c0, %c0_0] : memref<32x128xf32, #tpu.memory_space<vmem>>, vector<32x128xf32>
    %c0_1 = arith.constant 0 : index
    %c0_2 = arith.constant 0 : index
    %1 = vector.load %arg2[%c0_1, %c0_2] : memref<128x128xf32, #tpu.memory_space<vmem>>, vector<128x128xf32>
    %cst = arith.constant dense<0.000000e+00> : vector<32x128xf32>
    %2 = tpu.matmul %0, %1, %cst {dimension_numbers = #tpu.dot_dimension_numbers<[1], [0], [0], [1], [0, 0, 1, 1], [], []>} : vector<32x128xf32>, vector<128x128xf32>, vector<32x128xf32> -> vector<32x128xf32>
    %c0_3 = arith.constant 0 : index
    %c0_4 = arith.constant 0 : index
    %3 = vector.load %arg3[%c0_3, %c0_4] : memref<1x128xf32, #tpu.memory_space<vmem>>, vector<1x128xf32>
    %4 = vector.broadcast %3 : vector<1x128xf32> to vector<32x128xf32>
    %5 = arith.addf %2, %4 : vector<32x128xf32>
    %cst_5 = arith.constant 0.000000e+00 : f32
    %6 = vector.broadcast %cst_5 : f32 to vector<32x128xf32>
    %7 = arith.maximumf %5, %6 : vector<32x128xf32>
    %c0_6 = arith.constant 0 : index
    %c0_7 = arith.constant 0 : index
    %8 = vector.load %arg4[%c0_6, %c0_7] : memref<128x128xf32, #tpu.memory_space<vmem>>, vector<128x128xf32>
    %cst_8 = arith.constant dense<0.000000e+00> : vector<32x128xf32>
    %9 = tpu.matmul %7, %8, %cst_8 {dimension_numbers = #tpu.dot_dimension_numbers<[1], [0], [0], [1], [0, 0, 1, 1], [], []>} : vector<32x128xf32>, vector<128x128xf32>, vector<32x128xf32> -> vector<32x128xf32>
    %c0_9 = arith.constant 0 : index
    %c0_10 = arith.constant 0 : index
    %10 = vector.load %arg5[%c0_9, %c0_10] : memref<1x128xf32, #tpu.memory_space<vmem>>, vector<1x128xf32>
    %11 = vector.broadcast %10 : vector<1x128xf32> to vector<32x128xf32>
    %12 = arith.addf %9, %11 : vector<32x128xf32>
    %cst_11 = arith.constant 0.000000e+00 : f32
    %13 = vector.broadcast %cst_11 : f32 to vector<32x128xf32>
    %14 = arith.maximumf %12, %13 : vector<32x128xf32>
    %c0_12 = arith.constant 0 : index
    %c0_13 = arith.constant 0 : index
    %15 = vector.load %arg6[%c0_12, %c0_13] : memref<32x128xf32, #tpu.memory_space<vmem>>, vector<32x128xf32>
    tpu.vector_store %arg6[%c0_12, %c0_13], %14 {strides = array<i32>} : memref<32x128xf32, #tpu.memory_space<vmem>>, vector<32x128xf32>,
    return
  }
  func.func @transform_0(%arg0: i32) -> (i32, i32) {
    %c0_i32 = arith.constant 0 : i32
    %c0_i32_0 = arith.constant 0 : i32
    return %arg0, %c0_i32 : i32, i32
  }
  func.func @transform_1(%arg0: i32) -> (i32, i32) {
    %c0_i32 = arith.constant 0 : i32
    %c0_i32_0 = arith.constant 0 : i32
    %c0_i32_1 = arith.constant 0 : i32
    return %c0_i32, %c0_i32_0 : i32, i32
  }
  func.func @transform_2(%arg0: i32) -> (i32, i32) {
    %c0_i32 = arith.constant 0 : i32
    %c0_i32_0 = arith.constant 0 : i32
    %c0_i32_1 = arith.constant 0 : i32
    return %c0_i32, %c0_i32_0 : i32, i32
  }
  func.func @transform_3(%arg0: i32) -> (i32, i32) {
    %c0_i32 = arith.constant 0 : i32
    %c0_i32_0 = arith.constant 0 : i32
    %c0_i32_1 = arith.constant 0 : i32
    return %c0_i32, %c0_i32_0 : i32, i32
  }
  func.func @transform_4(%arg0: i32) -> (i32, i32) {
    %c0_i32 = arith.constant 0 : i32
    %c0_i32_0 = arith.constant 0 : i32
    %c0_i32_1 = arith.constant 0 : i32
    return %c0_i32, %c0_i32_0 : i32, i32
  }
  func.func @transform_5(%arg0: i32) -> (i32, i32) {
    %c0_i32 = arith.constant 0 : i32
    %c0_i32_0 = arith.constant 0 : i32
    return %arg0, %c0_i32 : i32, i32
  }
}

</mosaic_0001>

<llo_original>
// kernel: tpu_custom_call.1
$region0: #{tpu_custom_call.1}
  #allocation0 [shape = 'u32[]', space=smem, size = 0x4, offset = 0x4, fixed_abs, tag = 'smem constant byte address 0x4 - core index']
  #allocation1 [shape = 'u32[144,128]{1,0:T(1,128)}', space=vmem, size = 0x12000, scoped, tag = 'internal scratch']
  %s0 = inlined_call_operand.hbm [shape: f32[64,128], index: 0, kind: input, shape index: {}]
  %s1 = inlined_call_operand.hbm [shape: f32[128,128], index: 1, kind: input, shape index: {}]
  %s2 = inlined_call_operand.vmem [shape: f32[1,128], index: 2, kind: input, shape index: {}]
  %s3 = inlined_call_operand.hbm [shape: f32[128,128], index: 3, kind: input, shape index: {}]
  %s4 = inlined_call_operand.vmem [shape: f32[1,128], index: 4, kind: input, shape index: {}]
  %s5 = inlined_call_operand.hbm [shape: f32[64,128], index: 5, kind: output, shape index: {}]
  %s6 = sld [smem:[#allocation0]]
  $region65: #{tpu_custom_call.1} parent=0
    _
  %s8 = ssub.s32 1, %s6
  %s9 = scalar_select 0, %s8, %s6
  $region1: #{tpu_custom_call.1} parent=0
    #allocation2 [shape = 'u8[32768]{0}', space=vmem, size = 0x8000, scoped, tag = 'input window, operand 0']
    #allocation3 [shape = 's32[2]{0}', space=sflag, size = 0x8, scoped, tag = 'scoped memory for tpu_custom_call.1']
    #allocation4 [shape = 's32[2]{0}', space=sflag, size = 0x8, scoped, tag = 'scoped memory for tpu_custom_call.1']
    #allocation5 [shape = 'u8[65536]{0}', space=vmem, size = 0x10000, scoped, tag = 'input window, operand 1, single buffered']
    #allocation6 [shape = 's32[1]{0}', space=sflag, size = 0x4, scoped, tag = 'scoped memory for tpu_custom_call.1']
    #allocation7 [shape = 'u8[65536]{0}', space=vmem, size = 0x10000, scoped, tag = 'input window, operand 3, single buffered']
    #allocation8 [shape = 'u8[32768]{0}', space=vmem, size = 0x8000, scoped, tag = 'output window, operand 0']
    %10 = vsyncpa [#allocation3], 0
    %s11 = scalar_lea.sflag [#allocation3], 1
    %12 = vsyncpa %s11, 0
    %13 = vsyncpa [#allocation6], 0
    %14 = vsyncpa [#allocation4], 0
    %s15 = scalar_lea.sflag [#allocation4], 1
    %16 = vsyncpa %s15, 0
    loop: start=0, step=1, limit=4
    $region2: #{tpu_custom_call.1} parent=1 // loop_pre_header
      _
    $region3: #{tpu_custom_call.1} parent=1 // loop_header
      %s18 = sphi 0, %s22
      %p19 = scmp.ge.s32.totalorder %s18, 4
      %s28 = sphi 0, %s30
      %s31 = sphi 0, %s28
      %s32 = sphi 0, %s31
      %s48 = sphi 0, %s32
      %s52 = sphi 0, %s52
      %s54 = sphi 0, %s52
      %s55 = sphi 0, %s54
      %s69 = sphi 0, %s55
      %s73 = sphi 0, %s73
      %s75 = sphi 0, %s73
      %s76 = sphi 0, %s75
      %s90 = sphi 0, %s76
      %s94 = sphi 0, %s94
      %s96 = sphi 0, %s94
      %s97 = sphi 0, %s96
      %s111 = sphi 0, %s97
      %s115 = sphi 0, %s115
      %s117 = sphi 0, %s115
      %s118 = sphi 0, %s117
      %s132 = sphi 0, %s118
      %s138 = sphi 0, %s140
      %s141 = sphi 0, %s138
      %s142 = sphi 0, %s141
      %s158 = sphi 0, %s142
    $region4: #{tpu_custom_call.1} parent=1 // loop_header_branch
      %21 = sbr.rel (%p19) target = $region8
    $region5: #{tpu_custom_call.1} parent=1 // loop_body
      %s23 = ssub.s32 %s18, 1
      %s24 = ssub.s32 %s18, 2
      %s25 = sadd.s32 %s18, 1
      %s26 = ssub.s32 %s18, %s25
      %p27 = scmp.eq.s32.totalorder %s26, 0
      %s29 = sadd.s32 %s28, 1
      %s30 = scalar_select %p27, %s28, %s29
      %p33 = pneg %p27
      %p34 = scmp.eq.s32.totalorder %s18, 1
      %p35 = por %p33, %p34
      %p36 = scmp.ne.s32.totalorder %s28, %s31
      %p37 = scmp.eq.s32.totalorder %s18, 0
      %p38 = por %p36, %p37
      %p39 = scmp.ne.s32.totalorder %s28, %s31
      %p40 = scmp.eq.s32.totalorder %s23, 1
      %p41 = por %p39, %p40
      %p42 = scmp.ne.s32.totalorder %s31, %s32
      %p43 = scmp.eq.s32.totalorder %s23, 0
      %p44 = por %p42, %p43
      %p45 = scmp.ne.s32.totalorder %s31, %s32
      %p46 = scmp.eq.s32.totalorder %s24, 1
      %p47 = por %p45, %p46
      %p49 = scmp.ne.s32.totalorder %s32, %s48
      %p50 = scmp.eq.s32.totalorder %s24, 0
      %p51 = por %p49, %p50
      %s53 = sadd.s32 %s52, 1
      %p56 = scmp.eq.s32.totalorder %s18, 1
      %p57 = scmp.ne.s32.totalorder %s52, %s54
      %p58 = scmp.eq.s32.totalorder %s18, 0
      %p59 = por %p57, %p58
      %p60 = scmp.ne.s32.totalorder %s52, %s54
      %p61 = scmp.eq.s32.totalorder %s23, 1
      %p62 = por %p60, %p61
      %p63 = scmp.ne.s32.totalorder %s54, %s55
      %p64 = scmp.eq.s32.totalorder %s23, 0
      %p65 = por %p63, %p64
      %p66 = scmp.ne.s32.totalorder %s54, %s55
      %p67 = scmp.eq.s32.totalorder %s24, 1
      %p68 = por %p66, %p67
      %p70 = scmp.ne.s32.totalorder %s55, %s69
      %p71 = scmp.eq.s32.totalorder %s24, 0
      %p72 = por %p70, %p71
      %s74 = sadd.s32 %s73, 1
      %p77 = scmp.eq.s32.totalorder %s18, 1
      %p78 = scmp.ne.s32.totalorder %s73, %s75
      %p79 = scmp.eq.s32.totalorder %s18, 0
      %p80 = por %p78, %p79
      %p81 = scmp.ne.s32.totalorder %s73, %s75
      %p82 = scmp.eq.s32.totalorder %s23, 1
      %p83 = por %p81, %p82
      %p84 = scmp.ne.s32.totalorder %s75, %s76
      %p85 = scmp.eq.s32.totalorder %s23, 0
      %p86 = por %p84, %p85
      %p87 = scmp.ne.s32.totalorder %s75, %s76
      %p88 = scmp.eq.s32.totalorder %s24, 1
      %p89 = por %p87, %p88
      %p91 = scmp.ne.s32.totalorder %s76, %s90
      %p92 = scmp.eq.s32.totalorder %s24, 0
      %p93 = por %p91, %p92
      %s95 = sadd.s32 %s94, 1
      %p98 = scmp.eq.s32.totalorder %s18, 1
      %p99 = scmp.ne.s32.totalorder %s94, %s96
      %p100 = scmp.eq.s32.totalorder %s18, 0
      %p101 = por %p99, %p100
      %p102 = scmp.ne.s32.totalorder %s94, %s96
      %p103 = scmp.eq.s32.totalorder %s23, 1
      %p104 = por %p102, %p103
      %p105 = scmp.ne.s32.totalorder %s96, %s97
      %p106 = scmp.eq.s32.totalorder %s23, 0
      %p107 = por %p105, %p106
      %p108 = scmp.ne.s32.totalorder %s96, %s97
      %p109 = scmp.eq.s32.totalorder %s24, 1
      %p110 = por %p108, %p109
      %p112 = scmp.ne.s32.totalorder %s97, %s111
      %p113 = scmp.eq.s32.totalorder %s24, 0
      %p114 = por %p112, %p113
      %s116 = sadd.s32 %s115, 1
      %p119 = scmp.eq.s32.totalorder %s18, 1
      %p120 = scmp.ne.s32.totalorder %s115, %s117
      %p121 = scmp.eq.s32.totalorder %s18, 0
      %p122 = por %p120, %p121
      %p123 = scmp.ne.s32.totalorder %s115, %s117
      %p124 = scmp.eq.s32.totalorder %s23, 1
      %p125 = por %p123, %p124
      %p126 = scmp.ne.s32.totalorder %s117, %s118
      %p127 = scmp.eq.s32.totalorder %s23, 0
      %p128 = por %p126, %p127
      %p129 = scmp.ne.s32.totalorder %s117, %s118
      %p130 = scmp.eq.s32.totalorder %s24, 1
      %p131 = por %p129, %p130
      %p133 = scmp.ne.s32.totalorder %s118, %s132
      %p134 = scmp.eq.s32.totalorder %s24, 0
      %p135 = por %p133, %p134
      %s136 = ssub.s32 %s18, %s25
      %p137 = scmp.eq.s32.totalorder %s136, 0
      %s139 = sadd.s32 %s138, 1
      %s140 = scalar_select %p137, %s138, %s139
      %p143 = pneg %p137
      %p144 = scmp.eq.s32.totalorder %s18, 1
      %p145 = por %p143, %p144
      %p146 = scmp.ne.s32.totalorder %s138, %s141
      %p147 = scmp.eq.s32.totalorder %s18, 0
      %p148 = por %p146, %p147
      %p149 = scmp.ne.s32.totalorder %s138, %s141
      %p150 = scmp.eq.s32.totalorder %s23, 1
      %p151 = por %p149, %p150
      %p152 = scmp.ne.s32.totalorder %s141, %s142
      %p153 = scmp.eq.s32.totalorder %s23, 0
      %p154 = por %p152, %p153
      %p155 = scmp.ne.s32.totalorder %s141, %s142
      %p156 = scmp.eq.s32.totalorder %s24, 1
      %p157 = por %p155, %p156
      %p159 = scmp.ne.s32.totalorder %s142, %s158
      %p160 = scmp.eq.s32.totalorder %s24, 0
      %p161 = por %p159, %p160
      %p162 = scmp.le.s32.totalorder 1, %s18
      %p163 = scmp.lt.s32.totalorder %s18, 3
      %p164 = pnand %p162, %p163
      %p165 = pneg %p164
      // Predicated region
      $region9: #{tpu_custom_call.1} parent=5 // pred_check
        _
      $region10: #{tpu_custom_call.1} parent=5 // pred_check_branch
        %167 = sbr.rel (%p164) target = $region12
      $region11: #{tpu_custom_call.1} parent=5 // pred_region
        %s168 = ssub.s32 %s18, 1
        // Predicated region
        $region13: #{tpu_custom_call.1} parent=11 // pred_check
          %p169 = pneg %p65
        $region14: #{tpu_custom_call.1} parent=11 // pred_check_branch
          %171 = sbr.rel (%p169) target = $region16
        $region15: #{tpu_custom_call.1} parent=11 // pred_region
          %s173 = ssub.s32 2048, 2048
          %174 = vsyncadd [#allocation6], %s173
          %s175 = sshll.u32 [#allocation5], 4
          %s176 = int_to_ptr.vmem [resolvable:$true] %s175
          %181 = dma.hbm_to_vmem [thread:$0]  %s1, 2048, %s176, [#allocation6], 128, 128, 8
        $region16: #{tpu_custom_call.1} parent=11 // pred_fallthru
          _
        // Predicated region
        $region17: #{tpu_custom_call.1} parent=11 // pred_check
          %p182 = pneg %p86
        $region18: #{tpu_custom_call.1} parent=11 // pred_check_branch
          %184 = sbr.rel (%p182) target = $region20
        $region19: #{tpu_custom_call.1} parent=11 // pred_region
          _
        $region20: #{tpu_custom_call.1} parent=11 // pred_fallthru
          _
        // Predicated region
        $region21: #{tpu_custom_call.1} parent=11 // pred_check
          %p185 = pneg %p107
        $region22: #{tpu_custom_call.1} parent=11 // pred_check_branch
          %187 = sbr.rel (%p185) target = $region24
        $region23: #{tpu_custom_call.1} parent=11 // pred_region
          %s189 = ssub.s32 2048, 2048
          %190 = vsyncadd [#allocation6], %s189
          %s191 = sshll.u32 [#allocation7], 4
          %s192 = int_to_ptr.vmem [resolvable:$true] %s191
          %197 = dma.hbm_to_vmem [thread:$0]  %s3, 2048, %s192, [#allocation6], 128, 128, 8
        $region24: #{tpu_custom_call.1} parent=11 // pred_fallthru
          _
        // Predicated region
        $region25: #{tpu_custom_call.1} parent=11 // pred_check
          %p198 = pneg %p128
        $region26: #{tpu_custom_call.1} parent=11 // pred_check_branch
          %200 = sbr.rel (%p198) target = $region28
        $region27: #{tpu_custom_call.1} parent=11 // pred_region
          _
        $region28: #{tpu_custom_call.1} parent=11 // pred_fallthru
          _
      $region12: #{tpu_custom_call.1} parent=5 // pred_fallthru
        _
      %p201 = scmp.lt.s32.totalorder %s18, 2
      // Predicated region
      $region29: #{tpu_custom_call.1} parent=5 // pred_check
        %p202 = pneg %p201
      $region30: #{tpu_custom_call.1} parent=5 // pred_check_branch
        %204 = sbr.rel (%p202) target = $region32
      $region31: #{tpu_custom_call.1} parent=5 // pred_region
        // Predicated region
        $region33: #{tpu_custom_call.1} parent=31 // pred_check
          %p205 = pneg %p38
        $region34: #{tpu_custom_call.1} parent=31 // pred_check_branch
          %207 = sbr.rel (%p205) target = $region36
        $region35: #{tpu_custom_call.1} parent=31 // pred_region
          %s208 = sand.u32 %s28, 1
          %s209 = scalar_lea.sflag [#allocation3], %s208
          %s210 = sand.u32 %s28, 1
          %s211 = smul.addr %s210, 32
          %s212 = scalar_lea.vmem [#allocation2], %s211
          %s213 = smul.u32 4, %s18
          %s215 = ssub.s32 512, 512
          %216 = vsyncadd %s209, %s215
          %s217 = smul.addr %s213, 128
          %s218 = scalar_lea.hbm %s0, %s217
          %s219 = sshll.u32 %s212, 4
          %s220 = int_to_ptr.vmem [resolvable:$true] %s219
          %225 = dma.hbm_to_vmem [thread:$0]  %s218, 512, %s220, %s209, 128, 128, 8
        $region36: #{tpu_custom_call.1} parent=31 // pred_fallthru
          _
      $region32: #{tpu_custom_call.1} parent=5 // pred_fallthru
        _
      %p226 = scmp.le.s32.totalorder 1, %s18
      %p227 = scmp.lt.s32.totalorder %s18, 3
      %p228 = pnand %p226, %p227
      %p229 = pneg %p228
      // Predicated region
      $region37: #{tpu_custom_call.1} parent=5 // pred_check
        _
      $region38: #{tpu_custom_call.1} parent=5 // pred_check_branch
        %231 = sbr.rel (%p228) target = $region40
      $region39: #{tpu_custom_call.1} parent=5 // pred_region
        %s232 = ssub.s32 %s18, 1
        %s233 = sand.u32 %s31, 1
        %s234 = scalar_lea.sflag [#allocation3], %s233
        %s235 = sand.u32 %s31, 1
        %s236 = smul.addr %s235, 32
        %s237 = scalar_lea.vmem [#allocation2], %s236
        // Predicated region
        $region41: #{tpu_custom_call.1} parent=39 // pred_check
          %p238 = pneg %p44
        $region42: #{tpu_custom_call.1} parent=39 // pred_check_branch
          %240 = sbr.rel (%p238) target = $region44
        $region43: #{tpu_custom_call.1} parent=39 // pred_region
          %241 = dma.done %s234, 512
        $region44: #{tpu_custom_call.1} parent=39 // pred_fallthru
          _
        // Predicated region
        $region45: #{tpu_custom_call.1} parent=39 // pred_check
          %p242 = pneg %p65
        $region46: #{tpu_custom_call.1} parent=39 // pred_check_branch
          %244 = sbr.rel (%p242) target = $region48
        $region47: #{tpu_custom_call.1} parent=39 // pred_region
          %245 = dma.done [#allocation6], 2048
        $region48: #{tpu_custom_call.1} parent=39 // pred_fallthru
          _
        // Predicated region
        $region49: #{tpu_custom_call.1} parent=39 // pred_check
          %p246 = pneg %p107
        $region50: #{tpu_custom_call.1} parent=39 // pred_check_branch
          %248 = sbr.rel (%p246) target = $region52
        $region51: #{tpu_custom_call.1} parent=39 // pred_region
          %249 = dma.done [#allocation6], 2048
        $region52: #{tpu_custom_call.1} parent=39 // pred_fallthru
          _
        %s250 = sand.u32 %s31, 1
        %s251 = scalar_lea.sflag [#allocation3], %s250
        %s252 = sand.u32 %s31, 1
        %s253 = smul.addr %s252, 32
        %s254 = scalar_lea.vmem [#allocation2], %s253
        %p255 = pneg %p44
        %p256 = pneg %p41
        %p257 = pneg %p65
        %p258 = pneg %p62
        %p259 = pneg %p86
        %p260 = pneg %p83
        %p261 = pneg %p107
        %p262 = pneg %p104
        %p263 = pneg %p128
        %p264 = pneg %p125
        %p265 = pneg %p154
        %p266 = pneg %p151
        %s267 = sand.u32 %s141, 1
        %s268 = scalar_lea.sflag [#allocation4], %s267
        %s269 = sand.u32 %s141, 1
        %s270 = smul.addr %s269, 32
        %s271 = scalar_lea.vmem [#allocation8], %s270
        %s272 = smul.u32 4, %s23
        %s273 = smul.u32 4, %s23
        %v274 = vld [vmem:[%s237] sm:$0xff]
        %v275 = vld [vmem:[%s237 + $0x8] sm:$0xff]
        %v276 = vld [vmem:[%s237 + $0x10] sm:$0xff]
        %v277 = vld [vmem:[%s237 + $0x18] sm:$0xff]
        %v278 = vld [vmem:[#allocation5] sm:$0xff]
        %v279 = vld [vmem:[#allocation5 + $0x8] sm:$0xff]
        %v280 = vld [vmem:[#allocation5 + $0x10] sm:$0xff]
        %v281 = vld [vmem:[#allocation5 + $0x18] sm:$0xff]
        %v282 = vld [vmem:[#allocation5 + $0x20] sm:$0xff]
        %v283 = vld [vmem:[#allocation5 + $0x28] sm:$0xff]
        %v284 = vld [vmem:[#allocation5 + $0x30] sm:$0xff]
        %v285 = vld [vmem:[#allocation5 + $0x38] sm:$0xff]
        %v286 = vld [vmem:[#allocation5 + $0x40] sm:$0xff]
        %v287 = vld [vmem:[#allocation5 + $0x48] sm:$0xff]
        %v288 = vld [vmem:[#allocation5 + $0x50] sm:$0xff]
        %v289 = vld [vmem:[#allocation5 + $0x58] sm:$0xff]
        %v290 = vld [vmem:[#allocation5 + $0x60] sm:$0xff]
        %v291 = vld [vmem:[#allocation5 + $0x68] sm:$0xff]
        %v292 = vld [vmem:[#allocation5 + $0x70] sm:$0xff]
        %v293 = vld [vmem:[#allocation5 + $0x78] sm:$0xff]
        %v294 = vld [vmem:[%s2] sm:$0x1]
        %v296 = vlaneseq
        %v297 = vshrl.u32 %v296, 7
        %v298 = vsub.s32 0, %v297
        %v299 = vrot.slane %v294, %v298
        %301 = vmatprep.subr.mxu0 0.0
        %302 = vmatpush1.msra.mxu0 %v293
        %303 = vmatprep.subr.mxu0 0.0
        %304 = vmatpush1.msra.mxu0 %v292
        %305 = vmatprep.subr.mxu0 0.0
        %306 = vmatpush1.msra.mxu0 %v291
        %307 = vmatprep.subr.mxu0 0.0
        %308 = vmatpush1.msra.mxu0 %v290
        %309 = vmatprep.subr.mxu0 0.0
        %310 = vmatpush1.msra.mxu0 %v289
        %311 = vmatprep.subr.mxu0 0.0
        %312 = vmatpush1.msra.mxu0 %v288
        %313 = vmatprep.subr.mxu0 0.0
        %314 = vmatpush1.msra.mxu0 %v287
        %315 = vmatprep.subr.mxu0 0.0
        %316 = vmatpush1.msra.mxu0 %v286
        %317 = vmatprep.subr.mxu0 0.0
        %318 = vmatpush1.msra.mxu0 %v285
        %319 = vmatprep.subr.mxu0 0.0
        %320 = vmatpush1.msra.mxu0 %v284
        %321 = vmatprep.subr.mxu0 0.0
        %322 = vmatpush1.msra.mxu0 %v283
        %323 = vmatprep.subr.mxu0 0.0
        %324 = vmatpush1.msra.mxu0 %v282
        %325 = vmatprep.subr.mxu0 0.0
        %326 = vmatpush1.msra.mxu0 %v281
        %327 = vmatprep.subr.mxu0 0.0
        %328 = vmatpush1.msra.mxu0 %v280
        %329 = vmatprep.subr.mxu0 0.0
        %330 = vmatpush1.msra.mxu0 %v279
        %331 = vmatprep.subr.mxu0 0.0
        %332 = vmatpush1.msra.mxu0 %v278
        %333 = vmatprep.subr.mxu0 0.0
        %334 = vmatpush2.msra.mxu0 0.0
        %335 = vmatprep.subr.mxu0 0.0
        %336 = vmatpush2.msra.mxu0 0.0
        %337 = vmatprep.subr.mxu0 0.0
        %338 = vmatpush2.msra.mxu0 0.0
        %339 = vmatprep.subr.mxu0 0.0
        %340 = vmatpush2.msra.mxu0 0.0
        %341 = vmatprep.subr.mxu0 0.0
        %342 = vmatpush2.msra.mxu0 0.0
        %343 = vmatprep.subr.mxu0 0.0
        %344 = vmatpush2.msra.mxu0 0.0
        %345 = vmatprep.subr.mxu0 0.0
        %346 = vmatpush2.msra.mxu0 0.0
        %347 = vmatprep.subr.mxu0 0.0
        %348 = vmatpush2.msra.mxu0 0.0
        %349 = vmatprep.subr.mxu0 0.0
        %350 = vmatpush2.msra.mxu0 0.0
        %351 = vmatprep.subr.mxu0 0.0
        %352 = vmatpush2.msra.mxu0 0.0
        %353 = vmatprep.subr.mxu0 0.0
        %354 = vmatpush2.msra.mxu0 0.0
        %355 = vmatprep.subr.mxu0 0.0
        %356 = vmatpush2.msra.mxu0 0.0
        %357 = vmatprep.subr.mxu0 0.0
        %358 = vmatpush2.msra.mxu0 0.0
        %359 = vmatprep.subr.mxu0 0.0
        %360 = vmatpush2.msra.mxu0 0.0
        %361 = vmatprep.subr.mxu0 0.0
        %362 = vmatpush2.msra.mxu0 0.0
        %363 = vmatprep.subr.mxu0 0.0
        %364 = vmatpush2.msra.mxu0 0.0
        %365 = vmatprep.mubr.f32.mxu0 0.0
        %366 = vmatmul.mubr.f32.gmra.mxu0 %v274
        %v367 = vpop.f32.mrf.mxu0
        %v368 = vadd.f32 %v299, %v367
        %v369 = vpop.f32.mrf.mxu0
        %370 = vmatprep.mubr.f32.mxu0 0.0
        %371 = vmatmul.mubr.f32.gmra.mxu0 %v275
        %v372 = vpop.f32.mrf.mxu0
        %v373 = vadd.f32 %v299, %v372
        %v374 = vpop.f32.mrf.mxu0
        %375 = vmatprep.mubr.f32.mxu0 0.0
        %376 = vmatmul.mubr.f32.gmra.mxu0 %v276
        %v377 = vpop.f32.mrf.mxu0
        %v378 = vadd.f32 %v299, %v377
        %v379 = vpop.f32.mrf.mxu0
        %380 = vmatprep.mubr.f32.mxu0 0.0
        %381 = vmatmul.mubr.f32.gmra.mxu0 %v277
        %v382 = vpop.f32.mrf.mxu0
        %v383 = vadd.f32 %v299, %v382
        %v384 = vpop.f32.mrf.mxu0
        %385 = vdwg.mxu0
        %v386 = vmax.f32 %v368, 0.0
        %v387 = vmax.f32 %v373, 0.0
        %v388 = vmax.f32 %v378, 0.0
        %v389 = vmax.f32 %v383, 0.0
        %v390 = vld [vmem:[#allocation7] sm:$0xff]
        %v391 = vld [vmem:[#allocation7 + $0x8] sm:$0xff]
        %v392 = vld [vmem:[#allocation7 + $0x10] sm:$0xff]
        %v393 = vld [vmem:[#allocation7 + $0x18] sm:$0xff]
        %v394 = vld [vmem:[#allocation7 + $0x20] sm:$0xff]
        %v395 = vld [vmem:[#allocation7 + $0x28] sm:$0xff]
        %v396 = vld [vmem:[#allocation7 + $0x30] sm:$0xff]
        %v397 = vld [vmem:[#allocation7 + $0x38] sm:$0xff]
        %v398 = vld [vmem:[#allocation7 + $0x40] sm:$0xff]
        %v399 = vld [vmem:[#allocation7 + $0x48] sm:$0xff]
        %v400 = vld [vmem:[#allocation7 + $0x50] sm:$0xff]
        %v401 = vld [vmem:[#allocation7 + $0x58] sm:$0xff]
        %v402 = vld [vmem:[#allocation7 + $0x60] sm:$0xff]
        %v403 = vld [vmem:[#allocation7 + $0x68] sm:$0xff]
        %v404 = vld [vmem:[#allocation7 + $0x70] sm:$0xff]
        %v405 = vld [vmem:[#allocation7 + $0x78] sm:$0xff]
        %v406 = vld [vmem:[%s4] sm:$0x1]
        %v408 = vlaneseq
        %v409 = vshrl.u32 %v408, 7
        %v410 = vsub.s32 0, %v409
        %v411 = vrot.slane %v406, %v410
        %413 = vmatprep.subr.mxu0 0.0
        %414 = vmatpush1.msra.mxu0 %v405
        %415 = vmatprep.subr.mxu0 0.0
        %416 = vmatpush1.msra.mxu0 %v404
        %417 = vmatprep.subr.mxu0 0.0
        %418 = vmatpush1.msra.mxu0 %v403
        %419 = vmatprep.subr.mxu0 0.0
        %420 = vmatpush1.msra.mxu0 %v402
        %421 = vmatprep.subr.mxu0 0.0
        %422 = vmatpush1.msra.mxu0 %v401
        %423 = vmatprep.subr.mxu0 0.0
        %424 = vmatpush1.msra.mxu0 %v400
        %425 = vmatprep.subr.mxu0 0.0
        %426 = vmatpush1.msra.mxu0 %v399
        %427 = vmatprep.subr.mxu0 0.0
        %428 = vmatpush1.msra.mxu0 %v398
        %429 = vmatprep.subr.mxu0 0.0
        %430 = vmatpush1.msra.mxu0 %v397
        %431 = vmatprep.subr.mxu0 0.0
        %432 = vmatpush1.msra.mxu0 %v396
        %433 = vmatprep.subr.mxu0 0.0
        %434 = vmatpush1.msra.mxu0 %v395
        %435 = vmatprep.subr.mxu0 0.0
        %436 = vmatpush1.msra.mxu0 %v394
        %437 = vmatprep.subr.mxu0 0.0
        %438 = vmatpush1.msra.mxu0 %v393
        %439 = vmatprep.subr.mxu0 0.0
        %440 = vmatpush1.msra.mxu0 %v392
        %441 = vmatprep.subr.mxu0 0.0
        %442 = vmatpush1.msra.mxu0 %v391
        %443 = vmatprep.subr.mxu0 0.0
        %444 = vmatpush1.msra.mxu0 %v390
        %445 = vmatprep.subr.mxu0 0.0
        %446 = vmatpush2.msra.mxu0 0.0
        %447 = vmatprep.subr.mxu0 0.0
        %448 = vmatpush2.msra.mxu0 0.0
        %449 = vmatprep.subr.mxu0 0.0
        %450 = vmatpush2.msra.mxu0 0.0
        %451 = vmatprep.subr.mxu0 0.0
        %452 = vmatpush2.msra.mxu0 0.0
        %453 = vmatprep.subr.mxu0 0.0
        %454 = vmatpush2.msra.mxu0 0.0
        %455 = vmatprep.subr.mxu0 0.0
        %456 = vmatpush2.msra.mxu0 0.0
        %457 = vmatprep.subr.mxu0 0.0
        %458 = vmatpush2.msra.mxu0 0.0
        %459 = vmatprep.subr.mxu0 0.0
        %460 = vmatpush2.msra.mxu0 0.0
        %461 = vmatprep.subr.mxu0 0.0
        %462 = vmatpush2.msra.mxu0 0.0
        %463 = vmatprep.subr.mxu0 0.0
        %464 = vmatpush2.msra.mxu0 0.0
        %465 = vmatprep.subr.mxu0 0.0
        %466 = vmatpush2.msra.mxu0 0.0
        %467 = vmatprep.subr.mxu0 0.0
        %468 = vmatpush2.msra.mxu0 0.0
        %469 = vmatprep.subr.mxu0 0.0
        %470 = vmatpush2.msra.mxu0 0.0
        %471 = vmatprep.subr.mxu0 0.0
        %472 = vmatpush2.msra.mxu0 0.0
        %473 = vmatprep.subr.mxu0 0.0
        %474 = vmatpush2.msra.mxu0 0.0
        %475 = vmatprep.subr.mxu0 0.0
        %476 = vmatpush2.msra.mxu0 0.0
        %477 = vmatprep.mubr.f32.mxu0 0.0
        %478 = vmatmul.mubr.f32.gmra.mxu0 %v386
        %v479 = vpop.f32.mrf.mxu0
        %v480 = vadd.f32 %v411, %v479
        %v481 = vpop.f32.mrf.mxu0
        %482 = vmatprep.mubr.f32.mxu0 0.0
        %483 = vmatmul.mubr.f32.gmra.mxu0 %v387
        %v484 = vpop.f32.mrf.mxu0
        %v485 = vadd.f32 %v411, %v484
        %v486 = vpop.f32.mrf.mxu0
        %487 = vmatprep.mubr.f32.mxu0 0.0
        %488 = vmatmul.mubr.f32.gmra.mxu0 %v388
        %v489 = vpop.f32.mrf.mxu0
        %v490 = vadd.f32 %v411, %v489
        %v491 = vpop.f32.mrf.mxu0
        %492 = vmatprep.mubr.f32.mxu0 0.0
        %493 = vmatmul.mubr.f32.gmra.mxu0 %v389
        %v494 = vpop.f32.mrf.mxu0
        %v495 = vadd.f32 %v411, %v494
        %v496 = vpop.f32.mrf.mxu0
        %497 = vdwg.mxu0
        %v498 = vmax.f32 %v480, 0.0
        %v499 = vmax.f32 %v485, 0.0
        %v500 = vmax.f32 %v490, 0.0
        %v501 = vmax.f32 %v495, 0.0
        %502 = vst [vmem:[%s271] sm:$0xff] %v498
        %503 = vst [vmem:[%s271 + $0x8] sm:$0xff] %v499
        %504 = vst [vmem:[%s271 + $0x10] sm:$0xff] %v500
        %505 = vst [vmem:[%s271 + $0x18] sm:$0xff] %v501
        %s506 = sand.u32 %s141, 1
        %s507 = scalar_lea.sflag [#allocation4], %s506
        %s508 = sand.u32 %s141, 1
        %s509 = smul.addr %s508, 32
        %s510 = scalar_lea.vmem [#allocation8], %s509
        // Predicated region
        $region53: #{tpu_custom_call.1} parent=39 // pred_check
          %p511 = pneg %p151
        $region54: #{tpu_custom_call.1} parent=39 // pred_check_branch
          %513 = sbr.rel (%p511) target = $region56
        $region55: #{tpu_custom_call.1} parent=39 // pred_region
          %s514 = smul.u32 4, %s23
          %s516 = ssub.s32 512, 512
          %517 = vsyncadd %s507, %s516
          %s518 = smul.addr %s514, 128
          %s519 = scalar_lea.hbm %s5, %s518
          %s520 = sshll.u32 %s510, 4
          %s521 = int_to_ptr.vmem [resolvable:$true] %s520
          %526 = dma.vmem_to_hbm [thread:$0]  %s521, 512, %s519, %s507, 128, 128, 8
        $region56: #{tpu_custom_call.1} parent=39 // pred_fallthru
          _
      $region40: #{tpu_custom_call.1} parent=5 // pred_fallthru
        _
      %p527 = scmp.le.s32.totalorder 2, %s18
      // Predicated region
      $region57: #{tpu_custom_call.1} parent=5 // pred_check
        %p528 = pneg %p527
      $region58: #{tpu_custom_call.1} parent=5 // pred_check_branch
        %530 = sbr.rel (%p528) target = $region60
      $region59: #{tpu_custom_call.1} parent=5 // pred_region
        %s531 = ssub.s32 %s18, 2
        // Predicated region
        $region61: #{tpu_custom_call.1} parent=59 // pred_check
          %p532 = pneg %p157
        $region62: #{tpu_custom_call.1} parent=59 // pred_check_branch
          %534 = sbr.rel (%p532) target = $region64
        $region63: #{tpu_custom_call.1} parent=59 // pred_region
          %s535 = sand.u32 %s142, 1
          %s536 = scalar_lea.sflag [#allocation4], %s535
          %s537 = sand.u32 %s142, 1
          %s538 = smul.addr %s537, 32
          %s539 = scalar_lea.vmem [#allocation8], %s538
          %540 = dma.done %s536, 512
        $region64: #{tpu_custom_call.1} parent=59 // pred_fallthru
          _
      $region60: #{tpu_custom_call.1} parent=5 // pred_fallthru
        _
    $region6: #{tpu_custom_call.1} parent=1 // loop_footer
      %s22 = sadd.s32 1, %s18
    $region7: #{tpu_custom_call.1} parent=1 // loop_footer_branch
      %17 = sbr.rel target = $region3
    $region8: #{tpu_custom_call.1} parent=1 // loop_exit
      _
    %541 = vsyncpa [#allocation3], 1
    %s542 = scalar_lea.sflag [#allocation3], 1
    %543 = vsyncpa %s542, 1
    %544 = vsyncpa [#allocation6], 1
    %545 = vsyncpa [#allocation4], 1
    %s546 = scalar_lea.sflag [#allocation4], 1
    %547 = vsyncpa %s546, 1

// kernel: tpu_custom_call.1
$region0: #{tpu_custom_call.1}
  #allocation0 [shape = 'u32[]', space=smem, size = 0x4, offset = 0x4, fixed_abs, tag = 'smem constant byte address 0x4 - core index']
  #allocation1 [shape = 'u32[144,128]{1,0:T(1,128)}', space=vmem, size = 0x12000, scoped, tag = 'internal scratch']
  %s0 = inlined_call_operand.hbm [shape: f32[64,128], index: 0, kind: input, shape index: {}]
  %s1 = inlined_call_operand.hbm [shape: f32[128,128], index: 1, kind: input, shape index: {}]
  %s2 = inlined_call_operand.vmem [shape: f32[1,128], index: 2, kind: input, shape index: {}]
  %s3 = inlined_call_operand.hbm [shape: f32[128,128], index: 3, kind: input, shape index: {}]
  %s4 = inlined_call_operand.vmem [shape: f32[1,128], index: 4, kind: input, shape index: {}]
  %s5 = inlined_call_operand.hbm [shape: f32[64,128], index: 5, kind: output, shape index: {}]
  %s6 = sld [smem:[#allocation0]]
  $region65: #{tpu_custom_call.1} parent=0
    _
  %s8 = ssub.s32 1, %s6
  %s9 = scalar_select 0, %s8, %s6
  $region1: #{tpu_custom_call.1} parent=0
    #allocation2 [shape = 'u8[32768]{0}', space=vmem, size = 0x8000, scoped, tag = 'input window, operand 0']
    #allocation3 [shape = 's32[2]{0}', space=sflag, size = 0x8, scoped, tag = 'scoped memory for tpu_custom_call.1']
    #allocation4 [shape = 's32[2]{0}', space=sflag, size = 0x8, scoped, tag = 'scoped memory for tpu_custom_call.1']
    #allocation5 [shape = 'u8[65536]{0}', space=vmem, size = 0x10000, scoped, tag = 'input window, operand 1, single buffered']
    #allocation6 [shape = 's32[1]{0}', space=sflag, size = 0x4, scoped, tag = 'scoped memory for tpu_custom_call.1']
    #allocation7 [shape = 'u8[65536]{0}', space=vmem, size = 0x10000, scoped, tag = 'input window, operand 3, single buffered']
    #allocation8 [shape = 'u8[32768]{0}', space=vmem, size = 0x8000, scoped, tag = 'output window, operand 0']
    %10 = vsyncpa [#allocation3], 0
    %s11 = scalar_lea.sflag [#allocation3], 1
    %12 = vsyncpa %s11, 0
    %13 = vsyncpa [#allocation6], 0
    %14 = vsyncpa [#allocation4], 0
    %s15 = scalar_lea.sflag [#allocation4], 1
    %16 = vsyncpa %s15, 0
    loop: start=0, step=1, limit=4
    $region2: #{tpu_custom_call.1} parent=1 // loop_pre_header
      _
    $region3: #{tpu_custom_call.1} parent=1 // loop_header
      %s18 = sphi 0, %s22
      %p19 = scmp.ge.s32.totalorder %s18, 4
      %s28 = sphi 0, %s30
      %s31 = sphi 0, %s28
      %s32 = sphi 0, %s31
      %s48 = sphi 0, %s32
      %s52 = sphi 0, %s52
      %s54 = sphi 0, %s52
      %s55 = sphi 0, %s54
      %s69 = sphi 0, %s55
      %s73 = sphi 0, %s73
      %s75 = sphi 0, %s73
      %s76 = sphi 0, %s75
      %s90 = sphi 0, %s76
      %s94 = sphi 0, %s94
      %s96 = sphi 0, %s94
      %s97 = sphi 0, %s96
      %s111 = sphi 0, %s97
      %s115 = sphi 0, %s115
      %s117 = sphi 0, %s115
      %s118 = sphi 0, %s117
      %s132 = sphi 0, %s118
      %s138 = sphi 0, %s140
      %s141 = sphi 0, %s138
      %s142 = sphi 0, %s141
      %s158 = sphi 0, %s142
    $region4: #{tpu_custom_call.1} parent=1 // loop_header_branch
      %21 = sbr.rel (%p19) target = $region8
    $region5: #{tpu_custom_call.1} parent=1 // loop_body
      %s23 = ssub.s32 %s18, 1
      %s24 = ssub.s32 %s18, 2
      %s25 = sadd.s32 %s18, 1
      %s26 = ssub.s32 %s18, %s25
      %p27 = scmp.eq.s32.totalorder %s26, 0
      %s29 = sadd.s32 %s28, 1
      %s30 = scalar_select %p27, %s28, %s29
      %p33 = pneg %p27
      %p34 = scmp.eq.s32.totalorder %s18, 1
      %p35 = por %p33, %p34
      %p36 = scmp.ne.s32.totalorder %s28, %s31
      %p37 = scmp.eq.s32.totalorder %s18, 0
      %p38 = por %p36, %p37
      %p39 = scmp.ne.s32.totalorder %s28, %s31
      %p40 = scmp.eq.s32.totalorder %s23, 1
      %p41 = por %p39, %p40
      %p42 = scmp.ne.s32.totalorder %s31, %s32
      %p43 = scmp.eq.s32.totalorder %s23, 0
      %p44 = por %p42, %p43
      %p45 = scmp.ne.s32.totalorder %s31, %s32
      %p46 = scmp.eq.s32.totalorder %s24, 1
      %p47 = por %p45, %p46
      %p49 = scmp.ne.s32.totalorder %s32, %s48
      %p50 = scmp.eq.s32.totalorder %s24, 0
      %p51 = por %p49, %p50
      %s53 = sadd.s32 %s52, 1
      %p56 = scmp.eq.s32.totalorder %s18, 1
      %p57 = scmp.ne.s32.totalorder %s52, %s54
      %p58 = scmp.eq.s32.totalorder %s18, 0
      %p59 = por %p57, %p58
      %p60 = scmp.ne.s32.totalorder %s52, %s54
      %p61 = scmp.eq.s32.totalorder %s23, 1
      %p62 = por %p60, %p61
      %p63 = scmp.ne.s32.totalorder %s54, %s55
      %p64 = scmp.eq.s32.totalorder %s23, 0
      %p65 = por %p63, %p64
      %p66 = scmp.ne.s32.totalorder %s54, %s55
      %p67 = scmp.eq.s32.totalorder %s24, 1
      %p68 = por %p66, %p67
      %p70 = scmp.ne.s32.totalorder %s55, %s69
      %p71 = scmp.eq.s32.totalorder %s24, 0
      %p72 = por %p70, %p71
      %s74 = sadd.s32 %s73, 1
      %p77 = scmp.eq.s32.totalorder %s18, 1
      %p78 = scmp.ne.s32.totalorder %s73, %s75
      %p79 = scmp.eq.s32.totalorder %s18, 0
      %p80 = por %p78, %p79
      %p81 = scmp.ne.s32.totalorder %s73, %s75
      %p82 = scmp.eq.s32.totalorder %s23, 1
      %p83 = por %p81, %p82
      %p84 = scmp.ne.s32.totalorder %s75, %s76
      %p85 = scmp.eq.s32.totalorder %s23, 0
      %p86 = por %p84, %p85
      %p87 = scmp.ne.s32.totalorder %s75, %s76
      %p88 = scmp.eq.s32.totalorder %s24, 1
      %p89 = por %p87, %p88
      %p91 = scmp.ne.s32.totalorder %s76, %s90
      %p92 = scmp.eq.s32.totalorder %s24, 0
      %p93 = por %p91, %p92
      %s95 = sadd.s32 %s94, 1
      %p98 = scmp.eq.s32.totalorder %s18, 1
      %p99 = scmp.ne.s32.totalorder %s94, %s96
      %p100 = scmp.eq.s32.totalorder %s18, 0
      %p101 = por %p99, %p100
      %p102 = scmp.ne.s32.totalorder %s94, %s96
      %p103 = scmp.eq.s32.totalorder %s23, 1
      %p104 = por %p102, %p103
      %p105 = scmp.ne.s32.totalorder %s96, %s97
      %p106 = scmp.eq.s32.totalorder %s23, 0
      %p107 = por %p105, %p106
      %p108 = scmp.ne.s32.totalorder %s96, %s97
      %p109 = scmp.eq.s32.totalorder %s24, 1
      %p110 = por %p108, %p109
      %p112 = scmp.ne.s32.totalorder %s97, %s111
      %p113 = scmp.eq.s32.totalorder %s24, 0
      %p114 = por %p112, %p113
      %s116 = sadd.s32 %s115, 1
      %p119 = scmp.eq.s32.totalorder %s18, 1
      %p120 = scmp.ne.s32.totalorder %s115, %s117
      %p121 = scmp.eq.s32.totalorder %s18, 0
      %p122 = por %p120, %p121
      %p123 = scmp.ne.s32.totalorder %s115, %s117
      %p124 = scmp.eq.s32.totalorder %s23, 1
      %p125 = por %p123, %p124
      %p126 = scmp.ne.s32.totalorder %s117, %s118
      %p127 = scmp.eq.s32.totalorder %s23, 0
      %p128 = por %p126, %p127
      %p129 = scmp.ne.s32.totalorder %s117, %s118
      %p130 = scmp.eq.s32.totalorder %s24, 1
      %p131 = por %p129, %p130
      %p133 = scmp.ne.s32.totalorder %s118, %s132
      %p134 = scmp.eq.s32.totalorder %s24, 0
      %p135 = por %p133, %p134
      %s136 = ssub.s32 %s18, %s25
      %p137 = scmp.eq.s32.totalorder %s136, 0
      %s139 = sadd.s32 %s138, 1
      %s140 = scalar_select %p137, %s138, %s139
      %p143 = pneg %p137
      %p144 = scmp.eq.s32.totalorder %s18, 1
      %p145 = por %p143, %p144
      %p146 = scmp.ne.s32.totalorder %s138, %s141
      %p147 = scmp.eq.s32.totalorder %s18, 0
      %p148 = por %p146, %p147
      %p149 = scmp.ne.s32.totalorder %s138, %s141
      %p150 = scmp.eq.s32.totalorder %s23, 1
      %p151 = por %p149, %p150
      %p152 = scmp.ne.s32.totalorder %s141, %s142
      %p153 = scmp.eq.s32.totalorder %s23, 0
      %p154 = por %p152, %p153
      %p155 = scmp.ne.s32.totalorder %s141, %s142
      %p156 = scmp.eq.s32.totalorder %s24, 1
      %p157 = por %p155, %p156
      %p159 = scmp.ne.s32.totalorder %s142, %s158
      %p160 = scmp.eq.s32.totalorder %s24, 0
      %p161 = por %p159, %p160
      %p162 = scmp.le.s32.totalorder 1, %s18
      %p163 = scmp.lt.s32.totalorder %s18, 3
      %p164 = pnand %p162, %p163
      %p165 = pneg %p164
      // Predicated region
      $region9: #{tpu_custom_call.1} parent=5 // pred_check
        _
      $region10: #{tpu_custom_call.1} parent=5 // pred_check_branch
        %167 = sbr.rel (%p164) target = $region12
      $region11: #{tpu_custom_call.1} parent=5 // pred_region
        %s168 = ssub.s32 %s18, 1
        // Predicated region
        $region13: #{tpu_custom_call.1} parent=11 // pred_check
          %p169 = pneg %p65
        $region14: #{tpu_custom_call.1} parent=11 // pred_check_branch
          %171 = sbr.rel (%p169) target = $region16
        $region15: #{tpu_custom_call.1} parent=11 // pred_region
          %s173 = ssub.s32 2048, 2048
          %174 = vsyncadd [#allocation6], %s173
          %s175 = sshll.u32 [#allocation5], 4
          %s176 = int_to_ptr.vmem [resolvable:$true] %s175
          %181 = dma.hbm_to_vmem [thread:$0]  %s1, 2048, %s176, [#allocation6], 128, 128, 8
        $region16: #{tpu_custom_call.1} parent=11 // pred_fallthru
          _
        // Predicated region
        $region17: #{tpu_custom_call.1} parent=11 // pred_check
          %p182 = pneg %p86
        $region18: #{tpu_custom_call.1} parent=11 // pred_check_branch
          %184 = sbr.rel (%p182) target = $region20
        $region19: #{tpu_custom_call.1} parent=11 // pred_region
          _
        $region20: #{tpu_custom_call.1} parent=11 // pred_fallthru
          _
        // Predicated region
        $region21: #{tpu_custom_call.1} parent=11 // pred_check
          %p185 = pneg %p107
        $region22: #{tpu_custom_call.1} parent=11 // pred_check_branch
          %187 = sbr.rel (%p185) target = $region24
        $region23: #{tpu_custom_call.1} parent=11 // pred_region
          %s189 = ssub.s32 2048, 2048
          %190 = vsyncadd [#allocation6], %s189
          %s191 = sshll.u32 [#allocation7], 4
          %s192 = int_to_ptr.vmem [resolvable:$true] %s191
          %197 = dma.hbm_to_vmem [thread:$0]  %s3, 2048, %s192, [#allocation6], 128, 128, 8
        $region24: #{tpu_custom_call.1} parent=11 // pred_fallthru
          _
        // Predicated region
        $region25: #{tpu_custom_call.1} parent=11 // pred_check
          %p198 = pneg %p128
        $region26: #{tpu_custom_call.1} parent=11 // pred_check_branch
          %200 = sbr.rel (%p198) target = $region28
        $region27: #{tpu_custom_call.1} parent=11 // pred_region
          _
        $region28: #{tpu_custom_call.1} parent=11 // pred_fallthru
          _
      $region12: #{tpu_custom_call.1} parent=5 // pred_fallthru
        _
      %p201 = scmp.lt.s32.totalorder %s18, 2
      // Predicated region
      $region29: #{tpu_custom_call.1} parent=5 // pred_check
        %p202 = pneg %p201
      $region30: #{tpu_custom_call.1} parent=5 // pred_check_branch
        %204 = sbr.rel (%p202) target = $region32
      $region31: #{tpu_custom_call.1} parent=5 // pred_region
        // Predicated region
        $region33: #{tpu_custom_call.1} parent=31 // pred_check
          %p205 = pneg %p38
        $region34: #{tpu_custom_call.1} parent=31 // pred_check_branch
          %207 = sbr.rel (%p205) target = $region36
        $region35: #{tpu_custom_call.1} parent=31 // pred_region
          %s208 = sand.u32 %s28, 1
          %s209 = scalar_lea.sflag [#allocation3], %s208
          %s210 = sand.u32 %s28, 1
          %s211 = smul.addr %s210, 32
          %s212 = scalar_lea.vmem [#allocation2], %s211
          %s213 = smul.u32 4, %s18
          %s215 = ssub.s32 512, 512
          %216 = vsyncadd %s209, %s215
          %s217 = smul.addr %s213, 128
          %s218 = scalar_lea.hbm %s0, %s217
          %s219 = sshll.u32 %s212, 4
          %s220 = int_to_ptr.vmem [resolvable:$true] %s219
          %225 = dma.hbm_to_vmem [thread:$0]  %s218, 512, %s220, %s209, 128, 128, 8
        $region36: #{tpu_custom_call.1} parent=31 // pred_fallthru
          _
      $region32: #{tpu_custom_call.1} parent=5 // pred_fallthru
        _
      %p226 = scmp.le.s32.totalorder 1, %s18
      %p227 = scmp.lt.s32.totalorder %s18, 3
      %p228 = pnand %p226, %p227
      %p229 = pneg %p228
      // Predicated region
      $region37: #{tpu_custom_call.1} parent=5 // pred_check
        _
      $region38: #{tpu_custom_call.1} parent=5 // pred_check_branch
        %231 = sbr.rel (%p228) target = $region40
      $region39: #{tpu_custom_call.1} parent=5 // pred_region
        %s232 = ssub.s32 %s18, 1
        %s233 = sand.u32 %s31, 1
        %s234 = scalar_lea.sflag [#allocation3], %s233
        %s235 = sand.u32 %s31, 1
        %s236 = smul.addr %s235, 32
        %s237 = scalar_lea.vmem [#allocation2], %s236
        // Predicated region
        $region41: #{tpu_custom_call.1} parent=39 // pred_check
          %p238 = pneg %p44
        $region42: #{tpu_custom_call.1} parent=39 // pred_check_branch
          %240 = sbr.rel (%p238) target = $region44
        $region43: #{tpu_custom_call.1} parent=39 // pred_region
          %241 = dma.done %s234, 512
        $region44: #{tpu_custom_call.1} parent=39 // pred_fallthru
          _
        // Predicated region
        $region45: #{tpu_custom_call.1} parent=39 // pred_check
          %p242 = pneg %p65
        $region46: #{tpu_custom_call.1} parent=39 // pred_check_branch
          %244 = sbr.rel (%p242) target = $region48
        $region47: #{tpu_custom_call.1} parent=39 // pred_region
          %245 = dma.done [#allocation6], 2048
        $region48: #{tpu_custom_call.1} parent=39 // pred_fallthru
          _
        // Predicated region
        $region49: #{tpu_custom_call.1} parent=39 // pred_check
          %p246 = pneg %p107
        $region50: #{tpu_custom_call.1} parent=39 // pred_check_branch
          %248 = sbr.rel (%p246) target = $region52
        $region51: #{tpu_custom_call.1} parent=39 // pred_region
          %249 = dma.done [#allocation6], 2048
        $region52: #{tpu_custom_call.1} parent=39 // pred_fallthru
          _
        %s250 = sand.u32 %s31, 1
        %s251 = scalar_lea.sflag [#allocation3], %s250
        %s252 = sand.u32 %s31, 1
        %s253 = smul.addr %s252, 32
        %s254 = scalar_lea.vmem [#allocation2], %s253
        %p255 = pneg %p44
        %p256 = pneg %p41
        %p257 = pneg %p65
        %p258 = pneg %p62
        %p259 = pneg %p86
        %p260 = pneg %p83
        %p261 = pneg %p107
        %p262 = pneg %p104
        %p263 = pneg %p128
        %p264 = pneg %p125
        %p265 = pneg %p154
        %p266 = pneg %p151
        %s267 = sand.u32 %s141, 1
        %s268 = scalar_lea.sflag [#allocation4], %s267
        %s269 = sand.u32 %s141, 1
        %s270 = smul.addr %s269, 32
        %s271 = scalar_lea.vmem [#allocation8], %s270
        %s272 = smul.u32 4, %s23
        %s273 = smul.u32 4, %s23
        %v274 = vld [vmem:[%s237] sm:$0xff]
        %v275 = vld [vmem:[%s237 + $0x8] sm:$0xff]
        %v276 = vld [vmem:[%s237 + $0x10] sm:$0xff]
        %v277 = vld [vmem:[%s237 + $0x18] sm:$0xff]
        %v278 = vld [vmem:[#allocation5] sm:$0xff]
        %v279 = vld [vmem:[#allocation5 + $0x8] sm:$0xff]
        %v280 = vld [vmem:[#allocation5 + $0x10] sm:$0xff]
        %v281 = vld [vmem:[#allocation5 + $0x18] sm:$0xff]
        %v282 = vld [vmem:[#allocation5 + $0x20] sm:$0xff]
        %v283 = vld [vmem:[#allocation5 + $0x28] sm:$0xff]
        %v284 = vld [vmem:[#allocation5 + $0x30] sm:$0xff]
        %v285 = vld [vmem:[#allocation5 + $0x38] sm:$0xff]
        %v286 = vld [vmem:[#allocation5 + $0x40] sm:$0xff]
        %v287 = vld [vmem:[#allocation5 + $0x48] sm:$0xff]
        %v288 = vld [vmem:[#allocation5 + $0x50] sm:$0xff]
        %v289 = vld [vmem:[#allocation5 + $0x58] sm:$0xff]
        %v290 = vld [vmem:[#allocation5 + $0x60] sm:$0xff]
        %v291 = vld [vmem:[#allocation5 + $0x68] sm:$0xff]
        %v292 = vld [vmem:[#allocation5 + $0x70] sm:$0xff]
        %v293 = vld [vmem:[#allocation5 + $0x78] sm:$0xff]
        %v294 = vld [vmem:[%s2] sm:$0x1]
        %v296 = vlaneseq
        %v297 = vshrl.u32 %v296, 7
        %v298 = vsub.s32 0, %v297
        %v299 = vrot.slane %v294, %v298
        %301 = vmatprep.subr.mxu0 0.0
        %302 = vmatpush1.msra.mxu0 %v293
        %303 = vmatprep.subr.mxu0 0.0
        %304 = vmatpush1.msra.mxu0 %v292
        %305 = vmatprep.subr.mxu0 0.0
        %306 = vmatpush1.msra.mxu0 %v291
        %307 = vmatprep.subr.mxu0 0.0
        %308 = vmatpush1.msra.mxu0 %v290
        %309 = vmatprep.subr.mxu0 0.0
        %310 = vmatpush1.msra.mxu0 %v289
        %311 = vmatprep.subr.mxu0 0.0
        %312 = vmatpush1.msra.mxu0 %v288
        %313 = vmatprep.subr.mxu0 0.0
        %314 = vmatpush1.msra.mxu0 %v287
        %315 = vmatprep.subr.mxu0 0.0
        %316 = vmatpush1.msra.mxu0 %v286
        %317 = vmatprep.subr.mxu0 0.0
        %318 = vmatpush1.msra.mxu0 %v285
        %319 = vmatprep.subr.mxu0 0.0
        %320 = vmatpush1.msra.mxu0 %v284
        %321 = vmatprep.subr.mxu0 0.0
        %322 = vmatpush1.msra.mxu0 %v283
        %323 = vmatprep.subr.mxu0 0.0
        %324 = vmatpush1.msra.mxu0 %v282
        %325 = vmatprep.subr.mxu0 0.0
        %326 = vmatpush1.msra.mxu0 %v281
        %327 = vmatprep.subr.mxu0 0.0
        %328 = vmatpush1.msra.mxu0 %v280
        %329 = vmatprep.subr.mxu0 0.0
        %330 = vmatpush1.msra.mxu0 %v279
        %331 = vmatprep.subr.mxu0 0.0
        %332 = vmatpush1.msra.mxu0 %v278
        %333 = vmatprep.subr.mxu0 0.0
        %334 = vmatpush2.msra.mxu0 0.0
        %335 = vmatprep.subr.mxu0 0.0
        %336 = vmatpush2.msra.mxu0 0.0
        %337 = vmatprep.subr.mxu0 0.0
        %338 = vmatpush2.msra.mxu0 0.0
        %339 = vmatprep.subr.mxu0 0.0
        %340 = vmatpush2.msra.mxu0 0.0
        %341 = vmatprep.subr.mxu0 0.0
        %342 = vmatpush2.msra.mxu0 0.0
        %343 = vmatprep.subr.mxu0 0.0
        %344 = vmatpush2.msra.mxu0 0.0
        %345 = vmatprep.subr.mxu0 0.0
        %346 = vmatpush2.msra.mxu0 0.0
        %347 = vmatprep.subr.mxu0 0.0
        %348 = vmatpush2.msra.mxu0 0.0
        %349 = vmatprep.subr.mxu0 0.0
        %350 = vmatpush2.msra.mxu0 0.0
        %351 = vmatprep.subr.mxu0 0.0
        %352 = vmatpush2.msra.mxu0 0.0
        %353 = vmatprep.subr.mxu0 0.0
        %354 = vmatpush2.msra.mxu0 0.0
        %355 = vmatprep.subr.mxu0 0.0
        %356 = vmatpush2.msra.mxu0 0.0
        %357 = vmatprep.subr.mxu0 0.0
        %358 = vmatpush2.msra.mxu0 0.0
        %359 = vmatprep.subr.mxu0 0.0
        %360 = vmatpush2.msra.mxu0 0.0
        %361 = vmatprep.subr.mxu0 0.0
        %362 = vmatpush2.msra.mxu0 0.0
        %363 = vmatprep.subr.mxu0 0.0
        %364 = vmatpush2.msra.mxu0 0.0
        %365 = vmatprep.mubr.f32.mxu0 0.0
        %366 = vmatmul.mubr.f32.gmra.mxu0 %v274
        %v367 = vpop.f32.mrf.mxu0
        %v368 = vadd.f32 %v299, %v367
        %v369 = vpop.f32.mrf.mxu0
        %370 = vmatprep.mubr.f32.mxu0 0.0
        %371 = vmatmul.mubr.f32.gmra.mxu0 %v275
        %v372 = vpop.f32.mrf.mxu0
        %v373 = vadd.f32 %v299, %v372
        %v374 = vpop.f32.mrf.mxu0
        %375 = vmatprep.mubr.f32.mxu0 0.0
        %376 = vmatmul.mubr.f32.gmra.mxu0 %v276
        %v377 = vpop.f32.mrf.mxu0
        %v378 = vadd.f32 %v299, %v377
        %v379 = vpop.f32.mrf.mxu0
        %380 = vmatprep.mubr.f32.mxu0 0.0
        %381 = vmatmul.mubr.f32.gmra.mxu0 %v277
        %v382 = vpop.f32.mrf.mxu0
        %v383 = vadd.f32 %v299, %v382
        %v384 = vpop.f32.mrf.mxu0
        %385 = vdwg.mxu0
        %v386 = vmax.f32 %v368, 0.0
        %v387 = vmax.f32 %v373, 0.0
        %v388 = vmax.f32 %v378, 0.0
        %v389 = vmax.f32 %v383, 0.0
        %v390 = vld [vmem:[#allocation7] sm:$0xff]
        %v391 = vld [vmem:[#allocation7 + $0x8] sm:$0xff]
        %v392 = vld [vmem:[#allocation7 + $0x10] sm:$0xff]
        %v393 = vld [vmem:[#allocation7 + $0x18] sm:$0xff]
        %v394 = vld [vmem:[#allocation7 + $0x20] sm:$0xff]
        %v395 = vld [vmem:[#allocation7 + $0x28] sm:$0xff]
        %v396 = vld [vmem:[#allocation7 + $0x30] sm:$0xff]
        %v397 = vld [vmem:[#allocation7 + $0x38] sm:$0xff]
        %v398 = vld [vmem:[#allocation7 + $0x40] sm:$0xff]
        %v399 = vld [vmem:[#allocation7 + $0x48] sm:$0xff]
        %v400 = vld [vmem:[#allocation7 + $0x50] sm:$0xff]
        %v401 = vld [vmem:[#allocation7 + $0x58] sm:$0xff]
        %v402 = vld [vmem:[#allocation7 + $0x60] sm:$0xff]
        %v403 = vld [vmem:[#allocation7 + $0x68] sm:$0xff]
        %v404 = vld [vmem:[#allocation7 + $0x70] sm:$0xff]
        %v405 = vld [vmem:[#allocation7 + $0x78] sm:$0xff]
        %v406 = vld [vmem:[%s4] sm:$0x1]
        %v408 = vlaneseq
        %v409 = vshrl.u32 %v408, 7
        %v410 = vsub.s32 0, %v409
        %v411 = vrot.slane %v406, %v410
        %413 = vmatprep.subr.mxu0 0.0
        %414 = vmatpush1.msra.mxu0 %v405
        %415 = vmatprep.subr.mxu0 0.0
        %416 = vmatpush1.msra.mxu0 %v404
        %417 = vmatprep.subr.mxu0 0.0
        %418 = vmatpush1.msra.mxu0 %v403
        %419 = vmatprep.subr.mxu0 0.0
        %420 = vmatpush1.msra.mxu0 %v402
        %421 = vmatprep.subr.mxu0 0.0
        %422 = vmatpush1.msra.mxu0 %v401
        %423 = vmatprep.subr.mxu0 0.0
        %424 = vmatpush1.msra.mxu0 %v400
        %425 = vmatprep.subr.mxu0 0.0
        %426 = vmatpush1.msra.mxu0 %v399
        %427 = vmatprep.subr.mxu0 0.0
        %428 = vmatpush1.msra.mxu0 %v398
        %429 = vmatprep.subr.mxu0 0.0
        %430 = vmatpush1.msra.mxu0 %v397
        %431 = vmatprep.subr.mxu0 0.0
        %432 = vmatpush1.msra.mxu0 %v396
        %433 = vmatprep.subr.mxu0 0.0
        %434 = vmatpush1.msra.mxu0 %v395
        %435 = vmatprep.subr.mxu0 0.0
        %436 = vmatpush1.msra.mxu0 %v394
        %437 = vmatprep.subr.mxu0 0.0
        %438 = vmatpush1.msra.mxu0 %v393
        %439 = vmatprep.subr.mxu0 0.0
        %440 = vmatpush1.msra.mxu0 %v392
        %441 = vmatprep.subr.mxu0 0.0
        %442 = vmatpush1.msra.mxu0 %v391
        %443 = vmatprep.subr.mxu0 0.0
        %444 = vmatpush1.msra.mxu0 %v390
        %445 = vmatprep.subr.mxu0 0.0
        %446 = vmatpush2.msra.mxu0 0.0
        %447 = vmatprep.subr.mxu0 0.0
        %448 = vmatpush2.msra.mxu0 0.0
        %449 = vmatprep.subr.mxu0 0.0
        %450 = vmatpush2.msra.mxu0 0.0
        %451 = vmatprep.subr.mxu0 0.0
        %452 = vmatpush2.msra.mxu0 0.0
        %453 = vmatprep.subr.mxu0 0.0
        %454 = vmatpush2.msra.mxu0 0.0
        %455 = vmatprep.subr.mxu0 0.0
        %456 = vmatpush2.msra.mxu0 0.0
        %457 = vmatprep.subr.mxu0 0.0
        %458 = vmatpush2.msra.mxu0 0.0
        %459 = vmatprep.subr.mxu0 0.0
        %460 = vmatpush2.msra.mxu0 0.0
        %461 = vmatprep.subr.mxu0 0.0
        %462 = vmatpush2.msra.mxu0 0.0
        %463 = vmatprep.subr.mxu0 0.0
        %464 = vmatpush2.msra.mxu0 0.0
        %465 = vmatprep.subr.mxu0 0.0
        %466 = vmatpush2.msra.mxu0 0.0
        %467 = vmatprep.subr.mxu0 0.0
        %468 = vmatpush2.msra.mxu0 0.0
        %469 = vmatprep.subr.mxu0 0.0
        %470 = vmatpush2.msra.mxu0 0.0
        %471 = vmatprep.subr.mxu0 0.0
        %472 = vmatpush2.msra.mxu0 0.0
        %473 = vmatprep.subr.mxu0 0.0
        %474 = vmatpush2.msra.mxu0 0.0
        %475 = vmatprep.subr.mxu0 0.0
        %476 = vmatpush2.msra.mxu0 0.0
        %477 = vmatprep.mubr.f32.mxu0 0.0
        %478 = vmatmul.mubr.f32.gmra.mxu0 %v386
        %v479 = vpop.f32.mrf.mxu0
        %v480 = vadd.f32 %v411, %v479
        %v481 = vpop.f32.mrf.mxu0
        %482 = vmatprep.mubr.f32.mxu0 0.0
        %483 = vmatmul.mubr.f32.gmra.mxu0 %v387
        %v484 = vpop.f32.mrf.mxu0
        %v485 = vadd.f32 %v411, %v484
        %v486 = vpop.f32.mrf.mxu0
        %487 = vmatprep.mubr.f32.mxu0 0.0
        %488 = vmatmul.mubr.f32.gmra.mxu0 %v388
        %v489 = vpop.f32.mrf.mxu0
        %v490 = vadd.f32 %v411, %v489
        %v491 = vpop.f32.mrf.mxu0
        %492 = vmatprep.mubr.f32.mxu0 0.0
        %493 = vmatmul.mubr.f32.gmra.mxu0 %v389
        %v494 = vpop.f32.mrf.mxu0
        %v495 = vadd.f32 %v411, %v494
        %v496 = vpop.f32.mrf.mxu0
        %497 = vdwg.mxu0
        %v498 = vmax.f32 %v480, 0.0
        %v499 = vmax.f32 %v485, 0.0
        %v500 = vmax.f32 %v490, 0.0
        %v501 = vmax.f32 %v495, 0.0
        %502 = vst [vmem:[%s271] sm:$0xff] %v498
        %503 = vst [vmem:[%s271 + $0x8] sm:$0xff] %v499
        %504 = vst [vmem:[%s271 + $0x10] sm:$0xff] %v500
        %505 = vst [vmem:[%s271 + $0x18] sm:$0xff] %v501
        %s506 = sand.u32 %s141, 1
        %s507 = scalar_lea.sflag [#allocation4], %s506
        %s508 = sand.u32 %s141, 1
        %s509 = smul.addr %s508, 32
        %s510 = scalar_lea.vmem [#allocation8], %s509
        // Predicated region
        $region53: #{tpu_custom_call.1} parent=39 // pred_check
          %p511 = pneg %p151
        $region54: #{tpu_custom_call.1} parent=39 // pred_check_branch
          %513 = sbr.rel (%p511) target = $region56
        $region55: #{tpu_custom_call.1} parent=39 // pred_region
          %s514 = smul.u32 4, %s23
          %s516 = ssub.s32 512, 512
          %517 = vsyncadd %s507, %s516
          %s518 = smul.addr %s514, 128
          %s519 = scalar_lea.hbm %s5, %s518
          %s520 = sshll.u32 %s510, 4
          %s521 = int_to_ptr.vmem [resolvable:$true] %s520
          %526 = dma.vmem_to_hbm [thread:$0]  %s521, 512, %s519, %s507, 128, 128, 8
        $region56: #{tpu_custom_call.1} parent=39 // pred_fallthru
          _
      $region40: #{tpu_custom_call.1} parent=5 // pred_fallthru
        _
      %p527 = scmp.le.s32.totalorder 2, %s18
      // Predicated region
      $region57: #{tpu_custom_call.1} parent=5 // pred_check
        %p528 = pneg %p527
      $region58: #{tpu_custom_call.1} parent=5 // pred_check_branch
        %530 = sbr.rel (%p528) target = $region60
      $region59: #{tpu_custom_call.1} parent=5 // pred_region
        %s531 = ssub.s32 %s18, 2
        // Predicated region
        $region61: #{tpu_custom_call.1} parent=59 // pred_check
          %p532 = pneg %p157
        $region62: #{tpu_custom_call.1} parent=59 // pred_check_branch
          %534 = sbr.rel (%p532) target = $region64
        $region63: #{tpu_custom_call.1} parent=59 // pred_region
          %s535 = sand.u32 %s142, 1
          %s536 = scalar_lea.sflag [#allocation4], %s535
          %s537 = sand.u32 %s142, 1
          %s538 = smul.addr %s537, 32
          %s539 = scalar_lea.vmem [#allocation8], %s538
          %540 = dma.done %s536, 512
        $region64: #{tpu_custom_call.1} parent=59 // pred_fallthru
          _
      $region60: #{tpu_custom_call.1} parent=5 // pred_fallthru
        _
    $region6: #{tpu_custom_call.1} parent=1 // loop_footer
      %s22 = sadd.s32 1, %s18
    $region7: #{tpu_custom_call.1} parent=1 // loop_footer_branch
      %17 = sbr.rel target = $region3
    $region8: #{tpu_custom_call.1} parent=1 // loop_exit
      _
    %541 = vsyncpa [#allocation3], 1
    %s542 = scalar_lea.sflag [#allocation3], 1
    %543 = vsyncpa %s542, 1
    %544 = vsyncpa [#allocation6], 1
    %545 = vsyncpa [#allocation4], 1
    %s546 = scalar_lea.sflag [#allocation4], 1
    %547 = vsyncpa %s546, 1

</llo_original>
